<compile_context>
chip_gen: v7x
topology: tpu7x:2x2x1
jax: 0.10.0
libtpu: 0.0.40
codegen_flags: <defaults>
</compile_context>

<pallas_src>
import math
import jax
import jax.numpy as jnp
from jax.experimental import pallas as pl
from jax.experimental.pallas import tpu as pltpu

OUT_DIM = 6
PAD_OUT = 8  # pad the output feature axis 6 -> 8 (full-array last dim)


def _round_up(x, m):
    return ((x + m - 1) // m) * m


def mlp_kernel(x_ref, w1_ref, b1_ref, w2_ref, b2_ref, w3_ref, b3_ref, o_ref):
    # Cast streamed f32 activations to bf16 in-kernel (free under the
    # memory/MXU bound); accumulate in f32; elementwise work stays in f32.
    x = x_ref[...].astype(jnp.bfloat16)                          # (TB, D_in)

    h1 = jnp.dot(x, w1_ref[...], preferred_element_type=jnp.float32) + b1_ref[...]
    h1 = jnp.maximum(h1, 0.0)                                    # ReLU (f32)

    h2 = jnp.dot(h1.astype(jnp.bfloat16), w2_ref[...],
                 preferred_element_type=jnp.float32) + b2_ref[...]
    h2 = jnp.maximum(h2, 0.0)                                    # ReLU (f32)

    # w3/b3 are padded to 8 output lanes; padded bias lanes are -1e30 (f32) so
    # exp(pad - m) == 0 and they vanish from the softmax denominator.
    logits = jnp.dot(h2.astype(jnp.bfloat16), w3_ref[...],
                     preferred_element_type=jnp.float32) + b3_ref[...]

    m = jnp.max(logits, axis=1, keepdims=True)
    e = jnp.exp(logits - m)
    denom = jnp.sum(e, axis=1, keepdims=True)
    # Exact per-row divide (only TB divides) so rows sum to 1 to f32 precision.
    o_ref[...] = (e * (1.0 / denom)).astype(o_ref.dtype)


def mlp_forward(x, params, *, block_rows=2048):
    """x: (B, n_inputs) float32. Returns (B, 6) float32 softmax probabilities."""
    w1, b1, w2, b2, w3, b3 = params
    B, D = x.shape

    # 8-aligned row tiles; cap at ceil(B/2) so chips with 2 TensorCores (v7x)
    # get at least two grid steps whenever B is big enough to split.
    TB = min(_round_up(block_rows, 8), _round_up(max(1, -(-B // 2)), 8))
    grid = (pl.cdiv(B, TB),)

    # Weights as (in_features, out_features); bf16 MXU operands.
    w1b = w1.astype(jnp.bfloat16)
    w2b = w2.astype(jnp.bfloat16)
    # Layer-3 padded 6 -> 8 output lanes: zero weight columns, -1e30 bias lanes.
    w3p = jnp.zeros((w3.shape[0], PAD_OUT), jnp.bfloat16).at[:, :OUT_DIM].set(
        w3.astype(jnp.bfloat16))
    b3p = jnp.full((1, PAD_OUT), -1e30, jnp.float32).at[:, :OUT_DIM].set(
        b3.astype(jnp.float32))

    # Weights/biases: constant index_map -> fetched once, VMEM-resident.
    resident = lambda shape: pl.BlockSpec(shape, lambda i: (0, 0))

    out = pl.pallas_call(
        mlp_kernel,
        out_shape=jax.ShapeDtypeStruct((B, PAD_OUT), jnp.float32),
        grid=grid,
        in_specs=[
            pl.BlockSpec((TB, D), lambda i: (i, 0)),   # x tiles stream in (f32)
            resident(w1b.shape), resident(b1.shape),
            resident(w2b.shape), resident(b2.shape),
            resident(w3p.shape), resident(b3p.shape),
        ],
        out_specs=pl.BlockSpec((TB, PAD_OUT), lambda i: (i, 0)),
        compiler_params=pltpu.CompilerParams(
            dimension_semantics=("parallel",)),
    )(x, w1b, b1, w2b, b2, w3p, b3p)

    return out[:, :OUT_DIM]


def init_params(key, n_inputs):
    """Deterministic init mirroring the torch module's init scheme (f32 master)."""
    k = jax.random.split(key, 6)

    def kaiming_uniform(key, fan_in, fan_out):
        # torch kaiming_uniform_ with nonlinearity='relu': bound = sqrt(2)*sqrt(3/fan_in)
        bound = math.sqrt(2.0) * math.sqrt(3.0 / fan_in)
        return jax.random.uniform(key, (fan_in, fan_out), jnp.float32, -bound, bound)

    def xavier_uniform(key, fan_in, fan_out):
        bound = math.sqrt(6.0 / (fan_in + fan_out))
        return jax.random.uniform(key, (fan_in, fan_out), jnp.float32, -bound, bound)

    def bias_init(key, fan_in, fan_out):
        # torch Linear default bias init: uniform(-1/sqrt(fan_in), 1/sqrt(fan_in))
        bound = 1.0 / math.sqrt(fan_in)
        return jax.random.uniform(key, (1, fan_out), jnp.float32, -bound, bound)

    w1 = kaiming_uniform(k[0], n_inputs, 16)
    b1 = bias_init(k[1], n_inputs, 16)
    w2 = kaiming_uniform(k[2], 16, 8)
    b2 = bias_init(k[3], 16, 8)
    w3 = xavier_uniform(k[4], 8, 6)
    b3 = bias_init(k[5], 8, 6)
    return (w1, b1, w2, b2, w3, b3)


def mlp_reference(x, params):
    w1, b1, w2, b2, w3, b3 = params
    h1 = jnp.maximum(x @ w1 + b1, 0.0)
    h2 = jnp.maximum(h1 @ w2 + b2, 0.0)
    logits = h2 @ w3 + b3
    return jax.nn.softmax(logits, axis=1)


if __name__ == "__main__":
    key = jax.random.PRNGKey(0)
    n_inputs = 32
    batch = 8

    kx, kp = jax.random.split(key)
    x = jax.random.normal(kx, (batch, n_inputs), jnp.float32)
    params = init_params(kp, n_inputs)

    out = jax.block_until_ready(mlp_forward(x, params))

    ref = mlp_reference(x, params)
    assert out.shape == (batch, OUT_DIM)
    # bf16 MXU operands -> compare vs f32 reference with bf16-level tolerance.
    assert jnp.allclose(out, ref, atol=2e-2, rtol=2e-2), "mismatch vs JAX reference"
    # Exact per-row normalization -> rows sum to 1 to f32 precision.
    assert jnp.allclose(jnp.sum(out, axis=1), 1.0, atol=1e-3), "softmax rows must sum to 1"

    print("KERNEL_OK")
</pallas_src>

<mosaic_0001>
module attributes {stable_mosaic.version = 11 : i64} {
  func.func @mlp_kernel(%arg0: i32, %arg1: memref<8x32xf32, #tpu.memory_space<vmem>>, %arg2: memref<32x16xbf16, #tpu.memory_space<vmem>>, %arg3: memref<1x16xf32, #tpu.memory_space<vmem>>, %arg4: memref<16x8xbf16, #tpu.memory_space<vmem>>, %arg5: memref<1x8xf32, #tpu.memory_space<vmem>>, %arg6: memref<8x8xbf16, #tpu.memory_space<vmem>>, %arg7: memref<1x8xf32, #tpu.memory_space<vmem>>, %arg8: memref<8x8xf32, #tpu.memory_space<vmem>>) attributes {dimension_semantics = [#tpu.dimension_semantics<parallel>], iteration_bounds = array<i64: 1>, scalar_prefetch = 0 : i64, scratch_operands = 0 : i64, tpu.core_type = #tpu.core_type<tc>, window_params = [{transform_indices = @transform_0, window_bounds = array<i64: 8, 32>}, {pipeline_mode = #tpu.pipeline_mode<synchronous>, transform_indices = @transform_1, window_bounds = array<i64: 32, 16>}, {pipeline_mode = #tpu.pipeline_mode<synchronous>, transform_indices = @transform_2, window_bounds = array<i64: 1, 16>}, {pipeline_mode = #tpu.pipeline_mode<synchronous>, transform_indices = @transform_3, window_bounds = array<i64: 16, 8>}, {pipeline_mode = #tpu.pipeline_mode<synchronous>, transform_indices = @transform_4, window_bounds = array<i64: 1, 8>}, {pipeline_mode = #tpu.pipeline_mode<synchronous>, transform_indices = @transform_5, window_bounds = array<i64: 8, 8>}, {pipeline_mode = #tpu.pipeline_mode<synchronous>, transform_indices = @transform_6, window_bounds = array<i64: 1, 8>}, {transform_indices = @transform_7, window_bounds = array<i64: 8, 8>}]} {
    %c0 = arith.constant 0 : index
    %c0_0 = arith.constant 0 : index
    %0 = vector.load %arg1[%c0, %c0_0] : memref<8x32xf32, #tpu.memory_space<vmem>>, vector<8x32xf32>
    %1 = arith.truncf %0 : vector<8x32xf32> to vector<8x32xbf16>
    %c0_1 = arith.constant 0 : index
    %c0_2 = arith.constant 0 : index
    %2 = vector.load %arg2[%c0_1, %c0_2] : memref<32x16xbf16, #tpu.memory_space<vmem>>, vector<32x16xbf16>
    %cst = arith.constant dense<0.000000e+00> : vector<8x16xf32>
    %3 = tpu.matmul %1, %2, %cst {dimension_numbers = #tpu.dot_dimension_numbers<[1], [0], [0], [1], [0, 0, 1, 1], [], []>} : vector<8x32xbf16>, vector<32x16xbf16>, vector<8x16xf32> -> vector<8x16xf32>
    %c0_3 = arith.constant 0 : index
    %c0_4 = arith.constant 0 : index
    %4 = vector.load %arg3[%c0_3, %c0_4] : memref<1x16xf32, #tpu.memory_space<vmem>>, vector<1x16xf32>
    %5 = vector.broadcast %4 : vector<1x16xf32> to vector<8x16xf32>
    %6 = arith.addf %3, %5 : vector<8x16xf32>
    %cst_5 = arith.constant 0.000000e+00 : f32
    %7 = vector.broadcast %cst_5 : f32 to vector<8x16xf32>
    %8 = arith.maximumf %6, %7 : vector<8x16xf32>
    %9 = arith.truncf %8 : vector<8x16xf32> to vector<8x16xbf16>
    %c0_6 = arith.constant 0 : index
    %c0_7 = arith.constant 0 : index
    %10 = vector.load %arg4[%c0_6, %c0_7] : memref<16x8xbf16, #tpu.memory_space<vmem>>, vector<16x8xbf16>
    %cst_8 = arith.constant dense<0.000000e+00> : vector<8x8xf32>
    %11 = tpu.matmul %9, %10, %cst_8 {dimension_numbers = #tpu.dot_dimension_numbers<[1], [0], [0], [1], [0, 0, 1, 1], [], []>} : vector<8x16xbf16>, vector<16x8xbf16>, vector<8x8xf32> -> vector<8x8xf32>
    %c0_9 = arith.constant 0 : index
    %c0_10 = arith.constant 0 : index
    %12 = vector.load %arg5[%c0_9, %c0_10] : memref<1x8xf32, #tpu.memory_space<vmem>>, vector<1x8xf32>
    %13 = vector.broadcast %12 : vector<1x8xf32> to vector<8x8xf32>
    %14 = arith.addf %11, %13 : vector<8x8xf32>
    %cst_11 = arith.constant 0.000000e+00 : f32
    %15 = vector.broadcast %cst_11 : f32 to vector<8x8xf32>
    %16 = arith.maximumf %14, %15 : vector<8x8xf32>
    %17 = arith.truncf %16 : vector<8x8xf32> to vector<8x8xbf16>
    %c0_12 = arith.constant 0 : index
    %c0_13 = arith.constant 0 : index
    %18 = vector.load %arg6[%c0_12, %c0_13] : memref<8x8xbf16, #tpu.memory_space<vmem>>, vector<8x8xbf16>
    %cst_14 = arith.constant dense<0.000000e+00> : vector<8x8xf32>
    %19 = tpu.matmul %17, %18, %cst_14 {dimension_numbers = #tpu.dot_dimension_numbers<[1], [0], [0], [1], [0, 0, 1, 1], [], []>} : vector<8x8xbf16>, vector<8x8xbf16>, vector<8x8xf32> -> vector<8x8xf32>
    %c0_15 = arith.constant 0 : index
    %c0_16 = arith.constant 0 : index
    %20 = vector.load %arg7[%c0_15, %c0_16] : memref<1x8xf32, #tpu.memory_space<vmem>>, vector<1x8xf32>
    %21 = vector.broadcast %20 : vector<1x8xf32> to vector<8x8xf32>
    %22 = arith.addf %19, %21 : vector<8x8xf32>
    %cst_17 = arith.constant dense<0xFF800000> : vector<8xf32>
    %23 = vector.multi_reduction <maximumf>, %22, %cst_17 [1] : vector<8x8xf32> to vector<8xf32>
    %24 = vector.shape_cast %23 : vector<8xf32> to vector<8x1xf32>
    %25 = vector.broadcast %24 : vector<8x1xf32> to vector<8x8xf32>
    %26 = arith.subf %22, %25 : vector<8x8xf32>
    %27 = math.exp %26 : vector<8x8xf32>
    %cst_18 = arith.constant dense<0.000000e+00> : vector<8xf32>
    %28 = vector.multi_reduction <add>, %27, %cst_18 [1] : vector<8x8xf32> to vector<8xf32>
    %29 = vector.shape_cast %28 : vector<8xf32> to vector<8x1xf32>
    %cst_19 = arith.constant 1.000000e+00 : f32
    %30 = vector.broadcast %cst_19 : f32 to vector<8x1xf32>
    %31 = arith.divf %30, %29 : vector<8x1xf32>
    %32 = vector.broadcast %31 : vector<8x1xf32> to vector<8x8xf32>
    %33 = arith.mulf %27, %32 : vector<8x8xf32>
    %c0_20 = arith.constant 0 : index
    %c0_21 = arith.constant 0 : index
    %34 = vector.load %arg8[%c0_20, %c0_21] : memref<8x8xf32, #tpu.memory_space<vmem>>, vector<8x8xf32>
    tpu.vector_store %arg8[%c0_20, %c0_21], %33 {strides = array<i32>} : memref<8x8xf32, #tpu.memory_space<vmem>>, vector<8x8xf32>,
    return
  }
  func.func @transform_0(%arg0: i32) -> (i32, i32) {
    %c0_i32 = arith.constant 0 : i32
    %c0_i32_0 = arith.constant 0 : i32
    return %arg0, %c0_i32 : i32, i32
  }
  func.func @transform_1(%arg0: i32) -> (i32, i32) {
    %c0_i32 = arith.constant 0 : i32
    %c0_i32_0 = arith.constant 0 : i32
    %c0_i32_1 = arith.constant 0 : i32
    return %c0_i32, %c0_i32_0 : i32, i32
  }
  func.func @transform_2(%arg0: i32) -> (i32, i32) {
    %c0_i32 = arith.constant 0 : i32
    %c0_i32_0 = arith.constant 0 : i32
    %c0_i32_1 = arith.constant 0 : i32
    return %c0_i32, %c0_i32_0 : i32, i32
  }
  func.func @transform_3(%arg0: i32) -> (i32, i32) {
    %c0_i32 = arith.constant 0 : i32
    %c0_i32_0 = arith.constant 0 : i32
    %c0_i32_1 = arith.constant 0 : i32
    return %c0_i32, %c0_i32_0 : i32, i32
  }
  func.func @transform_4(%arg0: i32) -> (i32, i32) {
    %c0_i32 = arith.constant 0 : i32
    %c0_i32_0 = arith.constant 0 : i32
    %c0_i32_1 = arith.constant 0 : i32
    return %c0_i32, %c0_i32_0 : i32, i32
  }
  func.func @transform_5(%arg0: i32) -> (i32, i32) {
    %c0_i32 = arith.constant 0 : i32
    %c0_i32_0 = arith.constant 0 : i32
    %c0_i32_1 = arith.constant 0 : i32
    return %c0_i32, %c0_i32_0 : i32, i32
  }
  func.func @transform_6(%arg0: i32) -> (i32, i32) {
    %c0_i32 = arith.constant 0 : i32
    %c0_i32_0 = arith.constant 0 : i32
    %c0_i32_1 = arith.constant 0 : i32
    return %c0_i32, %c0_i32_0 : i32, i32
  }
  func.func @transform_7(%arg0: i32) -> (i32, i32) {
    %c0_i32 = arith.constant 0 : i32
    %c0_i32_0 = arith.constant 0 : i32
    return %arg0, %c0_i32 : i32, i32
  }
}

</mosaic_0001>

<llo_original>
// kernel: tpu_custom_call.1
$region0: #{tpu_custom_call.1}
  #allocation0 [shape = 'u32[]', space=smem, size = 0x4, offset = 0x4, fixed_abs, tag = 'smem constant byte address 0x4 - core index']
  #allocation1 [shape = 'u32[144,128]{1,0:T(1,128)}', space=vmem, size = 0x12000, scoped, tag = 'internal scratch']
  %s0 = inlined_call_operand.vmem [shape: f32[8,32], index: 0, kind: input, shape index: {}]
  %s1 = inlined_call_operand.vmem [shape: bf16[32,16], index: 1, kind: input, shape index: {}]
  %s2 = inlined_call_operand.vmem [shape: f32[1,16], index: 2, kind: input, shape index: {}]
  %s3 = inlined_call_operand.vmem [shape: bf16[16,8], index: 3, kind: input, shape index: {}]
  %s4 = inlined_call_operand.vmem [shape: f32[1,8], index: 4, kind: input, shape index: {}]
  %s5 = inlined_call_operand.vmem [shape: bf16[8,8], index: 5, kind: input, shape index: {}]
  %s6 = inlined_call_operand.vmem [shape: f32[1,8], index: 6, kind: input, shape index: {}]
  %s7 = inlined_call_operand.hbm [shape: f32[8,8], index: 7, kind: output, shape index: {}]
  %s8 = sld [smem:[#allocation0]]
  $region38: #{tpu_custom_call.1} parent=0
    _
  %s10 = ssub.s32 1, %s8
  %s11 = scalar_select 0, %s10, %s8
  $region1: #{tpu_custom_call.1} parent=0
    #allocation2 [shape = 'u8[4096]{0}', space=vmem, size = 0x1000, scoped, tag = 'output window, operand 0, single buffered']
    #allocation3 [shape = 's32[1]{0}', space=sflag, size = 0x4, scoped, tag = 'scoped memory for tpu_custom_call.1']
    %12 = vsyncpa [#allocation3], 0
    // Predicated region
    $region2: #{tpu_custom_call.1} parent=1 // pred_check
      _
    $region3: #{tpu_custom_call.1} parent=1 // pred_check_branch
      %14 = sbr.rel (0) target = $region5
    $region4: #{tpu_custom_call.1} parent=1 // pred_region
      _
    $region5: #{tpu_custom_call.1} parent=1 // pred_fallthru
      _
    // Predicated region
    $region6: #{tpu_custom_call.1} parent=1 // pred_check
      _
    $region7: #{tpu_custom_call.1} parent=1 // pred_check_branch
      %16 = sbr.rel (0) target = $region9
    $region8: #{tpu_custom_call.1} parent=1 // pred_region
      _
    $region9: #{tpu_custom_call.1} parent=1 // pred_fallthru
      _
    // Predicated region
    $region10: #{tpu_custom_call.1} parent=1 // pred_check
      _
    $region11: #{tpu_custom_call.1} parent=1 // pred_check_branch
      %18 = sbr.rel (0) target = $region13
    $region12: #{tpu_custom_call.1} parent=1 // pred_region
      _
    $region13: #{tpu_custom_call.1} parent=1 // pred_fallthru
      _
    // Predicated region
    $region14: #{tpu_custom_call.1} parent=1 // pred_check
      _
    $region15: #{tpu_custom_call.1} parent=1 // pred_check_branch
      %20 = sbr.rel (0) target = $region17
    $region16: #{tpu_custom_call.1} parent=1 // pred_region
      _
    $region17: #{tpu_custom_call.1} parent=1 // pred_fallthru
      _
    // Predicated region
    $region18: #{tpu_custom_call.1} parent=1 // pred_check
      _
    $region19: #{tpu_custom_call.1} parent=1 // pred_check_branch
      %22 = sbr.rel (0) target = $region21
    $region20: #{tpu_custom_call.1} parent=1 // pred_region
      _
    $region21: #{tpu_custom_call.1} parent=1 // pred_fallthru
      _
    // Predicated region
    $region22: #{tpu_custom_call.1} parent=1 // pred_check
      _
    $region23: #{tpu_custom_call.1} parent=1 // pred_check_branch
      %24 = sbr.rel (0) target = $region25
    $region24: #{tpu_custom_call.1} parent=1 // pred_region
      _
    $region25: #{tpu_custom_call.1} parent=1 // pred_fallthru
      _
    // Predicated region
    $region26: #{tpu_custom_call.1} parent=1 // pred_check
      _
    $region27: #{tpu_custom_call.1} parent=1 // pred_check_branch
      %26 = sbr.rel (0) target = $region29
    $region28: #{tpu_custom_call.1} parent=1 // pred_region
      _
    $region29: #{tpu_custom_call.1} parent=1 // pred_fallthru
      _
    %v28 = vld [vmem:[%s0] sm:$0xff]
    %v29 = vpack.c.bf16 %v28, %v28
    %v30 = vld [vmem:[%s1] sm:$0xf]
    %v31 = vld [vmem:[%s1 + $0x4] sm:$0xf]
    %v32 = vld [vmem:[%s1 + $0x8] sm:$0xf]
    %v33 = vld [vmem:[%s1 + $0xc] sm:$0xf]
    %v34 = vld [vmem:[%s2] sm:$0x1]
    %v36 = vlaneseq
    %v37 = vshrl.u32 %v36, 7
    %v38 = vsub.s32 0, %v37
    %v39 = vrot.slane %v34, %v38
    %v45 = vunpack.c.l.b16 %v30
    %v46 = vunpack.c.l.b16 %v31
    %v47 = vunpack.c.l.b16 %v32
    %v48 = vunpack.c.l.b16 %v33
    %v49 = vpack.c.b16 %v46, %v45
    %v50 = vpack.c.b16 %v48, %v47
    %vm53 = vcmask 261120
    %v55 = vsel %vm53, %v29, 0
    %57 = vmatprep.subr.bf16.mxu0 0
    %58 = vmatpush1.bf16.msra.mxu0 %v49
    %59 = vmatprep.subr.bf16.mxu0 0
    %60 = vmatpush1.bf16.msra.mxu0 %v50
    %61 = vmatprep.subr.bf16.mxu0 0
    %62 = vmatpush1.bf16.msra.mxu0 0
    %63 = vmatprep.subr.bf16.mxu0 0
    %64 = vmatpush1.bf16.msra.mxu0 0
    %65 = vmatprep.subr.bf16.mxu0 0
    %66 = vmatpush1.bf16.msra.mxu0 0
    %67 = vmatprep.subr.bf16.mxu0 0
    %68 = vmatpush1.bf16.msra.mxu0 0
    %69 = vmatprep.subr.bf16.mxu0 0
    %70 = vmatpush1.bf16.msra.mxu0 0
    %71 = vmatprep.subr.bf16.mxu0 0
    %72 = vmatpush1.bf16.msra.mxu0 0
    %73 = vmatprep.subr.bf16.mxu0 0
    %74 = vmatpush1.bf16.msra.mxu0 0
    %75 = vmatprep.subr.bf16.mxu0 0
    %76 = vmatpush1.bf16.msra.mxu0 0
    %77 = vmatprep.subr.bf16.mxu0 0
    %78 = vmatpush1.bf16.msra.mxu0 0
    %79 = vmatprep.subr.bf16.mxu0 0
    %80 = vmatpush1.bf16.msra.mxu0 0
    %81 = vmatprep.subr.bf16.mxu0 0
    %82 = vmatpush1.bf16.msra.mxu0 0
    %83 = vmatprep.subr.bf16.mxu0 0
    %84 = vmatpush1.bf16.msra.mxu0 0
    %85 = vmatprep.subr.bf16.mxu0 0
    %86 = vmatpush1.bf16.msra.mxu0 0
    %87 = vmatprep.subr.bf16.mxu0 0
    %88 = vmatpush1.bf16.msra.mxu0 0
    %89 = vmatprep.mubr.bf16.mxu0 0
    %90 = vmatmul.mubr.bf16.gmra.mrb[0].mxu0 %v55
    %v91 = vpop.f32.mrb[0].mxu0
    %v92 = vadd.f32 %v39, %v91
    %v93 = vpop.f32.mrb[0].mxu0
    %v94 = vpop.f32.mrb[0].mxu0
    %v95 = vpop.f32.mrb[0].mxu0
    %96 = vdwg.mxu0
    %v97 = vmax.f32 %v92, 0.0
    %v98 = vpack.c.bf16 %v97, %v97
    %v99 = vld [vmem:[%s3] sm:$0xf]
    %v100 = vld [vmem:[%s3 + $0x4] sm:$0xf]
    %v101 = vld [vmem:[%s4] sm:$0x1]
    %v103 = vlaneseq
    %v104 = vshrl.u32 %v103, 7
    %v105 = vsub.s32 0, %v104
    %v106 = vrot.slane %v101, %v105
    %v110 = vunpack.c.l.b16 %v99
    %v111 = vunpack.c.l.b16 %v100
    %v112 = vpack.c.b16 %v111, %v110
    %vm114 = vcmask 130048
    %v116 = vsel %vm114, %v98, 0
    %118 = vmatprep.subr.bf16.mxu0 0
    %119 = vmatpush1.bf16.msra.mxu0 %v112
    %120 = vmatprep.subr.bf16.mxu0 0
    %121 = vmatpush1.bf16.msra.mxu0 0
    %122 = vmatprep.subr.bf16.mxu0 0
    %123 = vmatpush1.bf16.msra.mxu0 0
    %124 = vmatprep.subr.bf16.mxu0 0
    %125 = vmatpush1.bf16.msra.mxu0 0
    %126 = vmatprep.subr.bf16.mxu0 0
    %127 = vmatpush1.bf16.msra.mxu0 0
    %128 = vmatprep.subr.bf16.mxu0 0
    %129 = vmatpush1.bf16.msra.mxu0 0
    %130 = vmatprep.subr.bf16.mxu0 0
    %131 = vmatpush1.bf16.msra.mxu0 0
    %132 = vmatprep.subr.bf16.mxu0 0
    %133 = vmatpush1.bf16.msra.mxu0 0
    %134 = vmatprep.subr.bf16.mxu0 0
    %135 = vmatpush1.bf16.msra.mxu0 0
    %136 = vmatprep.subr.bf16.mxu0 0
    %137 = vmatpush1.bf16.msra.mxu0 0
    %138 = vmatprep.subr.bf16.mxu0 0
    %139 = vmatpush1.bf16.msra.mxu0 0
    %140 = vmatprep.subr.bf16.mxu0 0
    %141 = vmatpush1.bf16.msra.mxu0 0
    %142 = vmatprep.subr.bf16.mxu0 0
    %143 = vmatpush1.bf16.msra.mxu0 0
    %144 = vmatprep.subr.bf16.mxu0 0
    %145 = vmatpush1.bf16.msra.mxu0 0
    %146 = vmatprep.subr.bf16.mxu0 0
    %147 = vmatpush1.bf16.msra.mxu0 0
    %148 = vmatprep.subr.bf16.mxu0 0
    %149 = vmatpush1.bf16.msra.mxu0 0
    %150 = vmatprep.mubr.bf16.mxu0 0
    %151 = vmatmul.mubr.bf16.gmra.mrb[0].mxu0 %v116
    %v152 = vpop.f32.mrb[0].mxu0
    %v153 = vadd.f32 %v106, %v152
    %v154 = vpop.f32.mrb[0].mxu0
    %v155 = vpop.f32.mrb[0].mxu0
    %v156 = vpop.f32.mrb[0].mxu0
    %157 = vdwg.mxu0
    %v158 = vmax.f32 %v153, 0.0
    %v159 = vpack.c.bf16 %v158, %v158
    %v160 = vld [vmem:[%s5] sm:$0xf]
    %v161 = vld [vmem:[%s6] sm:$0x1]
    %v163 = vlaneseq
    %v164 = vshrl.u32 %v163, 7
    %v165 = vsub.s32 0, %v164
    %v166 = vrot.slane %v161, %v165
    %vm168 = vcmask 64512
    %v170 = vsel %vm168, %v159, 0
    %vm172 = vcmask 1043456
    %v174 = vsel %vm172, %v160, 0
    %176 = vmatprep.subr.bf16.mxu0 0
    %177 = vmatpush1.bf16.msra.mxu0 %v174
    %178 = vmatprep.subr.bf16.mxu0 0
    %179 = vmatpush1.bf16.msra.mxu0 0
    %180 = vmatprep.subr.bf16.mxu0 0
    %181 = vmatpush1.bf16.msra.mxu0 0
    %182 = vmatprep.subr.bf16.mxu0 0
    %183 = vmatpush1.bf16.msra.mxu0 0
    %184 = vmatprep.subr.bf16.mxu0 0
    %185 = vmatpush1.bf16.msra.mxu0 0
    %186 = vmatprep.subr.bf16.mxu0 0
    %187 = vmatpush1.bf16.msra.mxu0 0
    %188 = vmatprep.subr.bf16.mxu0 0
    %189 = vmatpush1.bf16.msra.mxu0 0
    %190 = vmatprep.subr.bf16.mxu0 0
    %191 = vmatpush1.bf16.msra.mxu0 0
    %192 = vmatprep.subr.bf16.mxu0 0
    %193 = vmatpush1.bf16.msra.mxu0 0
    %194 = vmatprep.subr.bf16.mxu0 0
    %195 = vmatpush1.bf16.msra.mxu0 0
    %196 = vmatprep.subr.bf16.mxu0 0
    %197 = vmatpush1.bf16.msra.mxu0 0
    %198 = vmatprep.subr.bf16.mxu0 0
    %199 = vmatpush1.bf16.msra.mxu0 0
    %200 = vmatprep.subr.bf16.mxu0 0
    %201 = vmatpush1.bf16.msra.mxu0 0
    %202 = vmatprep.subr.bf16.mxu0 0
    %203 = vmatpush1.bf16.msra.mxu0 0
    %204 = vmatprep.subr.bf16.mxu0 0
    %205 = vmatpush1.bf16.msra.mxu0 0
    %206 = vmatprep.subr.bf16.mxu0 0
    %207 = vmatpush1.bf16.msra.mxu0 0
    %208 = vmatprep.mubr.bf16.mxu0 0
    %209 = vmatmul.mubr.bf16.gmra.mrb[0].mxu0 %v170
    %v210 = vpop.f32.mrb[0].mxu0
    %v211 = vadd.f32 %v166, %v210
    %v212 = vpop.f32.mrb[0].mxu0
    %v213 = vpop.f32.mrb[0].mxu0
    %v214 = vpop.f32.mrb[0].mxu0
    %215 = vdwg.mxu0
    %v216 = vsel %vm168, %v211, -inf
    %217 = vmax.xlane.f32.xlu0 %v216
    %v218 = vpop.xlane.xlu0 %217
    %v219 = vsub.f32 %v211, %v218
    %v220 = vmul.f32 %v219, 1.442695
    %v221 = vpow.pop %v220
    %v222 = vsel %vm168, %v221, 0.0
    %223 = vadd.xlane.f32.xlu0 %v222
    %v224 = vpop.xlane.xlu0 %223
    %v225 = vrcp.pop %v224
    %v226 = vmul.f32 1.0, %v225
    %v227 = vmul.f32 %v221, %v226
    %228 = vst.msk [vmem:[#allocation2] sm:$0xff] %vm168, %v227
    // Predicated region
    $region30: #{tpu_custom_call.1} parent=1 // pred_check
      _
    $region31: #{tpu_custom_call.1} parent=1 // pred_check_branch
      %230 = sbr.rel (0) target = $region33
    $region32: #{tpu_custom_call.1} parent=1 // pred_region
      %s232 = ssub.s32 128, 128
      %233 = vsyncadd [#allocation3], %s232
      %s235 = sshll.u32 [#allocation2], 4
      %s236 = int_to_ptr.vmem [resolvable:$true] %s235
      %238 = dma.vmem_to_hbm [thread:$0]  %s236, 128, %s7, [#allocation3]
    $region33: #{tpu_custom_call.1} parent=1 // pred_fallthru
      _
    // Predicated region
    $region34: #{tpu_custom_call.1} parent=1 // pred_check
      _
    $region35: #{tpu_custom_call.1} parent=1 // pred_check_branch
      %240 = sbr.rel (0) target = $region37
    $region36: #{tpu_custom_call.1} parent=1 // pred_region
      %241 = dma.done [#allocation3], 128
    $region37: #{tpu_custom_call.1} parent=1 // pred_fallthru
      _
    %242 = vsyncpa [#allocation3], 1

</llo_original>
